<compile_context>
chip_gen: v5e
topology: v5e:2x2
jax: 0.10.0
libtpu: 0.0.40
codegen_flags: <defaults>
</compile_context>

<pallas_src>
import jax
import jax.numpy as jnp
import numpy as np
from jax import lax
from jax.experimental import pallas as pl
from jax.experimental.pallas import tpu as pltpu

EPS = 1e-5  # nn.BatchNorm2d default


# ------------------------------ Pallas kernel -------------------------------


def _attn_basic_block_kernel(
    x_ref,        # (B*H, W*C) f32   input activations (also the residual)
    ntop_ref,     # (B*H, W*C) f32   0.0 on rows with h == 0,   else 1.0
    nbot_ref,     # (B*H, W*C) f32   0.0 on rows with h == H-1, else 1.0
    m1_ref,       # (3, W*C, W*C) bf16  conv1 banded row-matmul weights (per ky)
    m2_ref,       # (3, W*C, W*C) bf16  conv2 banded row-matmul weights (per ky)
    pool_ref,     # (W*C, W*C) f32  channel pooling / re-tiling matrix (/ B*H*W)
    g1_ref, b1_ref,   # (1, W*C) f32  bn1 gamma / beta, tiled over W
    g2_ref, b2_ref,   # (1, W*C) f32  bn2 gamma / beta, tiled over W
    o_ref,        # (B*H, W*C) f32
):
    x = x_ref[...]                     # residual stays resident; no re-slicing
    ntop = ntop_ref[...]
    nbot = nbot_ref[...]
    pool = pool_ref[...]
    n_rows = x.shape[0]                # B*H (static)

    def conv3x3(act, m_ref):
        # H halo: XLU sublane rotate + {0,1} edge mask (replaces padded scratch).
        up = pltpu.roll(act, 1, 0) * ntop             # act[b, h-1], 0 at h == 0
        dn = pltpu.roll(act, n_rows - 1, 0) * nbot    # act[b, h+1], 0 at h == H-1
        # Banded weights fold kx taps + W-edge zero-pad + channel mixing, so the
        # whole conv is 3 MXU matmuls (bf16 inputs, f32 accumulation).
        acc = jnp.dot(up.astype(jnp.bfloat16), m_ref[0],
                      preferred_element_type=jnp.float32)
        acc = acc + jnp.dot(act.astype(jnp.bfloat16), m_ref[1],
                            preferred_element_type=jnp.float32)
        acc = acc + jnp.dot(dn.astype(jnp.bfloat16), m_ref[2],
                            preferred_element_type=jnp.float32)
        return acc

    def batchnorm(y, gamma_t, beta_t):
        # Training-mode BN over (N,H,W).  `pool` both averages lanes belonging
        # to the same channel and re-tiles the per-channel result to (1, W*C).
        mean_t = jnp.dot(jnp.sum(y, axis=0, keepdims=True), pool,
                         preferred_element_type=jnp.float32)
        d = y - mean_t                                         # stable E[(x-m)^2]
        var_t = jnp.dot(jnp.sum(d * d, axis=0, keepdims=True), pool,
                        preferred_element_type=jnp.float32)
        scale_t = gamma_t * lax.rsqrt(var_t + EPS)             # fused scale (EUP)
        return d * scale_t + beta_t                            # one FMA per elem

    h1 = jnp.maximum(batchnorm(conv3x3(x, m1_ref), g1_ref[...], b1_ref[...]), 0.0)
    h2 = batchnorm(conv3x3(h1, m2_ref), g2_ref[...], b2_ref[...])
    o_ref[...] = jnp.maximum(h2 + x, 0.0)                      # residual + relu (f32)


# ------------------------------- wrapper -------------------------------------


def _build_conv_row_matrices(w_hwio, W):
    """Fold a (3,3,Cin,Cout) HWIO conv weight into 3 banded (W*Cin, W*Cout)
    matrices (one per ky) so that SAME conv == sum_ky shift_h(x, ky-1) @ M[ky]
    on rows whose lanes are laid out as (w, c)."""
    KH, KW, Cin, Cout = w_hwio.shape
    mats = []
    for ky in range(KH):
        m = jnp.zeros((W * Cin, W * Cout), jnp.float32)
        for kx in range(KW):
            # band[wi, wo] = 1  iff  wi == wo + kx - 1  (W-edge taps drop out => zero pad)
            band = jnp.eye(W, k=1 - kx, dtype=jnp.float32)
            m = m + jnp.kron(band, w_hwio[ky, kx].astype(jnp.float32))
        mats.append(m)
    return jnp.stack(mats, axis=0)          # (3, W*Cin, W*Cout)


def attn_basic_block(x_nhwc, w1, g1, b1, w2, g2, b2):
    """x_nhwc: (B,H,W,C) f32;  w1/w2: (3,3,C,C) HWIO;  g*/b*: (C,)."""
    B, H, W, C = x_nhwc.shape
    BH, WC = B * H, W * C

    # ---- lane-dense slab + precomputed constants (pure layout plumbing) ----
    x2 = x_nhwc.reshape(BH, WC)

    m1 = _build_conv_row_matrices(w1, W).astype(jnp.bfloat16)
    m2 = _build_conv_row_matrices(w2, W).astype(jnp.bfloat16)

    # (column sums) @ pool == per-channel mean, already re-tiled to (1, W*C).
    chan = jnp.arange(WC) % C
    pool = (chan[:, None] == chan[None, :]).astype(jnp.float32) / float(B * H * W)

    # H-halo edge masks: 1 everywhere except the h==0 / h==H-1 rows.
    h_idx = jnp.arange(BH) % H
    ntop = jnp.broadcast_to((h_idx != 0).astype(jnp.float32)[:, None], (BH, WC))
    nbot = jnp.broadcast_to((h_idx != H - 1).astype(jnp.float32)[:, None], (BH, WC))

    # gamma / beta pre-tiled to the (w, c) lane pattern.
    g1t, b1t = jnp.tile(g1, W)[None, :], jnp.tile(b1, W)[None, :]
    g2t, b2t = jnp.tile(g2, W)[None, :], jnp.tile(b2, W)[None, :]

    def full(arr):
        zeros = (0,) * arr.ndim
        return pl.BlockSpec(arr.shape, lambda i: zeros)

    # grid=(1,): training-mode BN needs global (N,H,W) statistics; the whole
    # problem is VMEM-resident, so a single step is correct and fastest here.
    out2d = pl.pallas_call(
        _attn_basic_block_kernel,
        out_shape=jax.ShapeDtypeStruct((BH, WC), jnp.float32),
        grid_spec=pltpu.PrefetchScalarGridSpec(
            num_scalar_prefetch=0,
            grid=(1,),
            in_specs=[full(x2), full(ntop), full(nbot), full(m1), full(m2),
                      full(pool), full(g1t), full(b1t), full(g2t), full(b2t)],
            out_specs=pl.BlockSpec((BH, WC), lambda i: (0, 0)),
        ),
        compiler_params=pltpu.CompilerParams(
            dimension_semantics=("arbitrary",),
            vmem_limit_bytes=16 * 1024 * 1024,   # explicit, tiny budget (v7x-safe)
        ),
    )(x2, ntop, nbot, m1, m2, pool, g1t, b1t, g2t, b2t)

    return out2d.reshape(B, H, W, C)


# --------------------------- pure-JAX reference ------------------------------


def _ref_block(x_nhwc, w1, g1, b1, w2, g2, b2):
    def conv(x, w):
        return lax.conv_general_dilated(
            x, w, window_strides=(1, 1), padding="SAME",
            dimension_numbers=("NHWC", "HWIO", "NHWC"))

    def bn(y, gamma, beta):
        mean = jnp.mean(y, axis=(0, 1, 2), keepdims=True)
        var = jnp.mean(jnp.square(y - mean), axis=(0, 1, 2), keepdims=True)
        return (y - mean) * lax.rsqrt(var + EPS) * gamma + beta

    out = jnp.maximum(bn(conv(x_nhwc, w1), g1, b1), 0.0)
    out = bn(conv(out, w2), g2, b2)
    return jnp.maximum(out + x_nhwc, 0.0)


# ----------------------------------- main -------------------------------------


if __name__ == "__main__":
    B, C, H, W = 2, 4, 16, 16  # inplanes = planes = 4, stride = 1, no downsample

    key = jax.random.PRNGKey(0)
    kx, kw1, kw2, kg1, kb1, kg2, kb2 = jax.random.split(key, 7)

    # PyTorch-side input would be NCHW (B, C, H, W); we generate NHWC directly.
    x = jax.random.normal(kx, (B, H, W, C), jnp.float32)

    # Synthetic parameters (conv3x3 bias=False weights in HWIO; BN affine params).
    w1 = jax.random.normal(kw1, (3, 3, C, C), jnp.float32) * 0.2
    w2 = jax.random.normal(kw2, (3, 3, C, C), jnp.float32) * 0.2
    g1 = 1.0 + 0.1 * jax.random.normal(kg1, (C,), jnp.float32)
    b1 = 0.1 * jax.random.normal(kb1, (C,), jnp.float32)
    g2 = 1.0 + 0.1 * jax.random.normal(kg2, (C,), jnp.float32)
    b2 = 0.1 * jax.random.normal(kb2, (C,), jnp.float32)

    out = attn_basic_block(x, w1, g1, b1, w2, g2, b2)
    out = jax.block_until_ready(out)

    ref = _ref_block(x, w1, g1, b1, w2, g2, b2)
    # Tolerance reflects bf16 MXU inputs (f32 accumulation / BN stats / residual)
    # checked against the pure-f32 reference.
    np.testing.assert_allclose(np.asarray(out), np.asarray(ref), atol=5e-2, rtol=5e-2)

    print("KERNEL_OK")
</pallas_src>

<mosaic_0001>
module attributes {stable_mosaic.version = 11 : i64} {
  func.func @_attn_basic_block_kernel(%arg0: i32, %arg1: memref<32x64xf32, #tpu.memory_space<vmem>>, %arg2: memref<32x64xf32, #tpu.memory_space<vmem>>, %arg3: memref<32x64xf32, #tpu.memory_space<vmem>>, %arg4: memref<3x64x64xbf16, #tpu.memory_space<vmem>>, %arg5: memref<3x64x64xbf16, #tpu.memory_space<vmem>>, %arg6: memref<64x64xf32, #tpu.memory_space<vmem>>, %arg7: memref<1x64xf32, #tpu.memory_space<vmem>>, %arg8: memref<1x64xf32, #tpu.memory_space<vmem>>, %arg9: memref<1x64xf32, #tpu.memory_space<vmem>>, %arg10: memref<1x64xf32, #tpu.memory_space<vmem>>, %arg11: memref<32x64xf32, #tpu.memory_space<vmem>>) attributes {dimension_semantics = [#tpu.dimension_semantics<arbitrary>], iteration_bounds = array<i64: 1>, scalar_prefetch = 0 : i64, scratch_operands = 0 : i64, tpu.core_type = #tpu.core_type<tc>, window_params = [{pipeline_mode = #tpu.pipeline_mode<synchronous>, transform_indices = @transform_0, window_bounds = array<i64: 32, 64>}, {pipeline_mode = #tpu.pipeline_mode<synchronous>, transform_indices = @transform_1, window_bounds = array<i64: 32, 64>}, {pipeline_mode = #tpu.pipeline_mode<synchronous>, transform_indices = @transform_2, window_bounds = array<i64: 32, 64>}, {pipeline_mode = #tpu.pipeline_mode<synchronous>, transform_indices = @transform_3, window_bounds = array<i64: 3, 64, 64>}, {pipeline_mode = #tpu.pipeline_mode<synchronous>, transform_indices = @transform_4, window_bounds = array<i64: 3, 64, 64>}, {pipeline_mode = #tpu.pipeline_mode<synchronous>, transform_indices = @transform_5, window_bounds = array<i64: 64, 64>}, {pipeline_mode = #tpu.pipeline_mode<synchronous>, transform_indices = @transform_6, window_bounds = array<i64: 1, 64>}, {pipeline_mode = #tpu.pipeline_mode<synchronous>, transform_indices = @transform_7, window_bounds = array<i64: 1, 64>}, {pipeline_mode = #tpu.pipeline_mode<synchronous>, transform_indices = @transform_8, window_bounds = array<i64: 1, 64>}, {pipeline_mode = #tpu.pipeline_mode<synchronous>, transform_indices = @transform_9, window_bounds = array<i64: 1, 64>}, {pipeline_mode = #tpu.pipeline_mode<synchronous>, transform_indices = @transform_10, window_bounds = array<i64: 32, 64>}]} {
    %c0 = arith.constant 0 : index
    %c0_0 = arith.constant 0 : index
    %0 = vector.load %arg1[%c0, %c0_0] : memref<32x64xf32, #tpu.memory_space<vmem>>, vector<32x64xf32>
    %c0_1 = arith.constant 0 : index
    %c0_2 = arith.constant 0 : index
    %1 = vector.load %arg2[%c0_1, %c0_2] : memref<32x64xf32, #tpu.memory_space<vmem>>, vector<32x64xf32>
    %c0_3 = arith.constant 0 : index
    %c0_4 = arith.constant 0 : index
    %2 = vector.load %arg3[%c0_3, %c0_4] : memref<32x64xf32, #tpu.memory_space<vmem>>, vector<32x64xf32>
    %c0_5 = arith.constant 0 : index
    %c0_6 = arith.constant 0 : index
    %3 = vector.load %arg6[%c0_5, %c0_6] : memref<64x64xf32, #tpu.memory_space<vmem>>, vector<64x64xf32>
    %c1_i32 = arith.constant 1 : i32
    %4 = tpu.dynamic_rotate %0 by %c1_i32 dim 0 : vector<32x64xf32>, i32 -> vector<32x64xf32>
    %5 = arith.mulf %4, %1 : vector<32x64xf32>
    %c31_i32 = arith.constant 31 : i32
    %6 = tpu.dynamic_rotate %0 by %c31_i32 dim 0 : vector<32x64xf32>, i32 -> vector<32x64xf32>
    %7 = arith.mulf %6, %2 : vector<32x64xf32>
    %8 = arith.truncf %5 : vector<32x64xf32> to vector<32x64xbf16>
    %c0_7 = arith.constant 0 : index
    %c0_8 = arith.constant 0 : index
    %c0_9 = arith.constant 0 : index
    %9 = vector.load %arg4[%c0_7, %c0_8, %c0_9] : memref<3x64x64xbf16, #tpu.memory_space<vmem>>, vector<1x64x64xbf16>
    %10 = vector.shape_cast %9 : vector<1x64x64xbf16> to vector<64x64xbf16>
    %cst = arith.constant dense<0.000000e+00> : vector<32x64xf32>
    %11 = tpu.matmul %8, %10, %cst {dimension_numbers = #tpu.dot_dimension_numbers<[1], [0], [0], [1], [0, 0, 1, 1], [], []>} : vector<32x64xbf16>, vector<64x64xbf16>, vector<32x64xf32> -> vector<32x64xf32>
    %12 = arith.truncf %0 : vector<32x64xf32> to vector<32x64xbf16>
    %c1 = arith.constant 1 : index
    %c0_10 = arith.constant 0 : index
    %c0_11 = arith.constant 0 : index
    %13 = vector.load %arg4[%c1, %c0_10, %c0_11] : memref<3x64x64xbf16, #tpu.memory_space<vmem>>, vector<1x64x64xbf16>
    %14 = vector.shape_cast %13 : vector<1x64x64xbf16> to vector<64x64xbf16>
    %cst_12 = arith.constant dense<0.000000e+00> : vector<32x64xf32>
    %15 = tpu.matmul %12, %14, %cst_12 {dimension_numbers = #tpu.dot_dimension_numbers<[1], [0], [0], [1], [0, 0, 1, 1], [], []>} : vector<32x64xbf16>, vector<64x64xbf16>, vector<32x64xf32> -> vector<32x64xf32>
    %16 = arith.addf %11, %15 : vector<32x64xf32>
    %17 = arith.truncf %7 : vector<32x64xf32> to vector<32x64xbf16>
    %c2 = arith.constant 2 : index
    %c0_13 = arith.constant 0 : index
    %c0_14 = arith.constant 0 : index
    %18 = vector.load %arg4[%c2, %c0_13, %c0_14] : memref<3x64x64xbf16, #tpu.memory_space<vmem>>, vector<1x64x64xbf16>
    %19 = vector.shape_cast %18 : vector<1x64x64xbf16> to vector<64x64xbf16>
    %cst_15 = arith.constant dense<0.000000e+00> : vector<32x64xf32>
    %20 = tpu.matmul %17, %19, %cst_15 {dimension_numbers = #tpu.dot_dimension_numbers<[1], [0], [0], [1], [0, 0, 1, 1], [], []>} : vector<32x64xbf16>, vector<64x64xbf16>, vector<32x64xf32> -> vector<32x64xf32>
    %21 = arith.addf %16, %20 : vector<32x64xf32>
    %c0_16 = arith.constant 0 : index
    %c0_17 = arith.constant 0 : index
    %22 = vector.load %arg7[%c0_16, %c0_17] : memref<1x64xf32, #tpu.memory_space<vmem>>, vector<1x64xf32>
    %c0_18 = arith.constant 0 : index
    %c0_19 = arith.constant 0 : index
    %23 = vector.load %arg8[%c0_18, %c0_19] : memref<1x64xf32, #tpu.memory_space<vmem>>, vector<1x64xf32>
    %cst_20 = arith.constant dense<0.000000e+00> : vector<64xf32>
    %24 = vector.multi_reduction <add>, %21, %cst_20 [0] : vector<32x64xf32> to vector<64xf32>
    %25 = vector.shape_cast %24 : vector<64xf32> to vector<1x64xf32>
    %cst_21 = arith.constant dense<0.000000e+00> : vector<1x64xf32>
    %26 = tpu.matmul %25, %3, %cst_21 {dimension_numbers = #tpu.dot_dimension_numbers<[1], [0], [0], [1], [0, 0, 1, 1], [], []>} : vector<1x64xf32>, vector<64x64xf32>, vector<1x64xf32> -> vector<1x64xf32>
    %27 = vector.broadcast %26 : vector<1x64xf32> to vector<32x64xf32>
    %28 = arith.subf %21, %27 : vector<32x64xf32>
    %29 = arith.mulf %28, %28 : vector<32x64xf32>
    %cst_22 = arith.constant dense<0.000000e+00> : vector<64xf32>
    %30 = vector.multi_reduction <add>, %29, %cst_22 [0] : vector<32x64xf32> to vector<64xf32>
    %31 = vector.shape_cast %30 : vector<64xf32> to vector<1x64xf32>
    %cst_23 = arith.constant dense<0.000000e+00> : vector<1x64xf32>
    %32 = tpu.matmul %31, %3, %cst_23 {dimension_numbers = #tpu.dot_dimension_numbers<[1], [0], [0], [1], [0, 0, 1, 1], [], []>} : vector<1x64xf32>, vector<64x64xf32>, vector<1x64xf32> -> vector<1x64xf32>
    %cst_24 = arith.constant 9.99999974E-6 : f32
    %33 = vector.broadcast %cst_24 : f32 to vector<1x64xf32>
    %34 = arith.addf %32, %33 : vector<1x64xf32>
    %35 = math.rsqrt %34 : vector<1x64xf32>
    %36 = arith.mulf %22, %35 : vector<1x64xf32>
    %37 = vector.broadcast %36 : vector<1x64xf32> to vector<32x64xf32>
    %38 = arith.mulf %28, %37 : vector<32x64xf32>
    %39 = vector.broadcast %23 : vector<1x64xf32> to vector<32x64xf32>
    %40 = arith.addf %38, %39 : vector<32x64xf32>
    %cst_25 = arith.constant 0.000000e+00 : f32
    %41 = vector.broadcast %cst_25 : f32 to vector<32x64xf32>
    %42 = arith.maximumf %40, %41 : vector<32x64xf32>
    %c1_i32_26 = arith.constant 1 : i32
    %43 = tpu.dynamic_rotate %42 by %c1_i32_26 dim 0 : vector<32x64xf32>, i32 -> vector<32x64xf32>
    %44 = arith.mulf %43, %1 : vector<32x64xf32>
    %c31_i32_27 = arith.constant 31 : i32
    %45 = tpu.dynamic_rotate %42 by %c31_i32_27 dim 0 : vector<32x64xf32>, i32 -> vector<32x64xf32>
    %46 = arith.mulf %45, %2 : vector<32x64xf32>
    %47 = arith.truncf %44 : vector<32x64xf32> to vector<32x64xbf16>
    %c0_28 = arith.constant 0 : index
    %c0_29 = arith.constant 0 : index
    %c0_30 = arith.constant 0 : index
    %48 = vector.load %arg5[%c0_28, %c0_29, %c0_30] : memref<3x64x64xbf16, #tpu.memory_space<vmem>>, vector<1x64x64xbf16>
    %49 = vector.shape_cast %48 : vector<1x64x64xbf16> to vector<64x64xbf16>
    %cst_31 = arith.constant dense<0.000000e+00> : vector<32x64xf32>
    %50 = tpu.matmul %47, %49, %cst_31 {dimension_numbers = #tpu.dot_dimension_numbers<[1], [0], [0], [1], [0, 0, 1, 1], [], []>} : vector<32x64xbf16>, vector<64x64xbf16>, vector<32x64xf32> -> vector<32x64xf32>
    %51 = arith.truncf %42 : vector<32x64xf32> to vector<32x64xbf16>
    %c1_32 = arith.constant 1 : index
    %c0_33 = arith.constant 0 : index
    %c0_34 = arith.constant 0 : index
    %52 = vector.load %arg5[%c1_32, %c0_33, %c0_34] : memref<3x64x64xbf16, #tpu.memory_space<vmem>>, vector<1x64x64xbf16>
    %53 = vector.shape_cast %52 : vector<1x64x64xbf16> to vector<64x64xbf16>
    %cst_35 = arith.constant dense<0.000000e+00> : vector<32x64xf32>
    %54 = tpu.matmul %51, %53, %cst_35 {dimension_numbers = #tpu.dot_dimension_numbers<[1], [0], [0], [1], [0, 0, 1, 1], [], []>} : vector<32x64xbf16>, vector<64x64xbf16>, vector<32x64xf32> -> vector<32x64xf32>
    %55 = arith.addf %50, %54 : vector<32x64xf32>
    %56 = arith.truncf %46 : vector<32x64xf32> to vector<32x64xbf16>
    %c2_36 = arith.constant 2 : index
    %c0_37 = arith.constant 0 : index
    %c0_38 = arith.constant 0 : index
    %57 = vector.load %arg5[%c2_36, %c0_37, %c0_38] : memref<3x64x64xbf16, #tpu.memory_space<vmem>>, vector<1x64x64xbf16>
    %58 = vector.shape_cast %57 : vector<1x64x64xbf16> to vector<64x64xbf16>
    %cst_39 = arith.constant dense<0.000000e+00> : vector<32x64xf32>
    %59 = tpu.matmul %56, %58, %cst_39 {dimension_numbers = #tpu.dot_dimension_numbers<[1], [0], [0], [1], [0, 0, 1, 1], [], []>} : vector<32x64xbf16>, vector<64x64xbf16>, vector<32x64xf32> -> vector<32x64xf32>
    %60 = arith.addf %55, %59 : vector<32x64xf32>
    %c0_40 = arith.constant 0 : index
    %c0_41 = arith.constant 0 : index
    %61 = vector.load %arg9[%c0_40, %c0_41] : memref<1x64xf32, #tpu.memory_space<vmem>>, vector<1x64xf32>
    %c0_42 = arith.constant 0 : index
    %c0_43 = arith.constant 0 : index
    %62 = vector.load %arg10[%c0_42, %c0_43] : memref<1x64xf32, #tpu.memory_space<vmem>>, vector<1x64xf32>
    %cst_44 = arith.constant dense<0.000000e+00> : vector<64xf32>
    %63 = vector.multi_reduction <add>, %60, %cst_44 [0] : vector<32x64xf32> to vector<64xf32>
    %64 = vector.shape_cast %63 : vector<64xf32> to vector<1x64xf32>
    %cst_45 = arith.constant dense<0.000000e+00> : vector<1x64xf32>
    %65 = tpu.matmul %64, %3, %cst_45 {dimension_numbers = #tpu.dot_dimension_numbers<[1], [0], [0], [1], [0, 0, 1, 1], [], []>} : vector<1x64xf32>, vector<64x64xf32>, vector<1x64xf32> -> vector<1x64xf32>
    %66 = vector.broadcast %65 : vector<1x64xf32> to vector<32x64xf32>
    %67 = arith.subf %60, %66 : vector<32x64xf32>
    %68 = arith.mulf %67, %67 : vector<32x64xf32>
    %cst_46 = arith.constant dense<0.000000e+00> : vector<64xf32>
    %69 = vector.multi_reduction <add>, %68, %cst_46 [0] : vector<32x64xf32> to vector<64xf32>
    %70 = vector.shape_cast %69 : vector<64xf32> to vector<1x64xf32>
    %cst_47 = arith.constant dense<0.000000e+00> : vector<1x64xf32>
    %71 = tpu.matmul %70, %3, %cst_47 {dimension_numbers = #tpu.dot_dimension_numbers<[1], [0], [0], [1], [0, 0, 1, 1], [], []>} : vector<1x64xf32>, vector<64x64xf32>, vector<1x64xf32> -> vector<1x64xf32>
    %cst_48 = arith.constant 9.99999974E-6 : f32
    %72 = vector.broadcast %cst_48 : f32 to vector<1x64xf32>
    %73 = arith.addf %71, %72 : vector<1x64xf32>
    %74 = math.rsqrt %73 : vector<1x64xf32>
    %75 = arith.mulf %61, %74 : vector<1x64xf32>
    %76 = vector.broadcast %75 : vector<1x64xf32> to vector<32x64xf32>
    %77 = arith.mulf %67, %76 : vector<32x64xf32>
    %78 = vector.broadcast %62 : vector<1x64xf32> to vector<32x64xf32>
    %79 = arith.addf %77, %78 : vector<32x64xf32>
    %80 = arith.addf %79, %0 : vector<32x64xf32>
    %cst_49 = arith.constant 0.000000e+00 : f32
    %81 = vector.broadcast %cst_49 : f32 to vector<32x64xf32>
    %82 = arith.maximumf %80, %81 : vector<32x64xf32>
    %c0_50 = arith.constant 0 : index
    %c0_51 = arith.constant 0 : index
    %83 = vector.load %arg11[%c0_50, %c0_51] : memref<32x64xf32, #tpu.memory_space<vmem>>, vector<32x64xf32>
    tpu.vector_store %arg11[%c0_50, %c0_51], %82 {strides = array<i32>} : memref<32x64xf32, #tpu.memory_space<vmem>>, vector<32x64xf32>,
    return
  }
  func.func @transform_0(%arg0: i32) -> (i32, i32) {
    %c0_i32 = arith.constant 0 : i32
    %c0_i32_0 = arith.constant 0 : i32
    %c0_i32_1 = arith.constant 0 : i32
    return %c0_i32, %c0_i32_0 : i32, i32
  }
  func.func @transform_1(%arg0: i32) -> (i32, i32) {
    %c0_i32 = arith.constant 0 : i32
    %c0_i32_0 = arith.constant 0 : i32
    %c0_i32_1 = arith.constant 0 : i32
    return %c0_i32, %c0_i32_0 : i32, i32
  }
  func.func @transform_2(%arg0: i32) -> (i32, i32) {
    %c0_i32 = arith.constant 0 : i32
    %c0_i32_0 = arith.constant 0 : i32
    %c0_i32_1 = arith.constant 0 : i32
    return %c0_i32, %c0_i32_0 : i32, i32
  }
  func.func @transform_3(%arg0: i32) -> (i32, i32, i32) {
    %c0_i32 = arith.constant 0 : i32
    %c0_i32_0 = arith.constant 0 : i32
    %c0_i32_1 = arith.constant 0 : i32
    %c0_i32_2 = arith.constant 0 : i32
    return %c0_i32, %c0_i32_0, %c0_i32_1 : i32, i32, i32
  }
  func.func @transform_4(%arg0: i32) -> (i32, i32, i32) {
    %c0_i32 = arith.constant 0 : i32
    %c0_i32_0 = arith.constant 0 : i32
    %c0_i32_1 = arith.constant 0 : i32
    %c0_i32_2 = arith.constant 0 : i32
    return %c0_i32, %c0_i32_0, %c0_i32_1 : i32, i32, i32
  }
  func.func @transform_5(%arg0: i32) -> (i32, i32) {
    %c0_i32 = arith.constant 0 : i32
    %c0_i32_0 = arith.constant 0 : i32
    %c0_i32_1 = arith.constant 0 : i32
    return %c0_i32, %c0_i32_0 : i32, i32
  }
  func.func @transform_6(%arg0: i32) -> (i32, i32) {
    %c0_i32 = arith.constant 0 : i32
    %c0_i32_0 = arith.constant 0 : i32
    %c0_i32_1 = arith.constant 0 : i32
    return %c0_i32, %c0_i32_0 : i32, i32
  }
  func.func @transform_7(%arg0: i32) -> (i32, i32) {
    %c0_i32 = arith.constant 0 : i32
    %c0_i32_0 = arith.constant 0 : i32
    %c0_i32_1 = arith.constant 0 : i32
    return %c0_i32, %c0_i32_0 : i32, i32
  }
  func.func @transform_8(%arg0: i32) -> (i32, i32) {
    %c0_i32 = arith.constant 0 : i32
    %c0_i32_0 = arith.constant 0 : i32
    %c0_i32_1 = arith.constant 0 : i32
    return %c0_i32, %c0_i32_0 : i32, i32
  }
  func.func @transform_9(%arg0: i32) -> (i32, i32) {
    %c0_i32 = arith.constant 0 : i32
    %c0_i32_0 = arith.constant 0 : i32
    %c0_i32_1 = arith.constant 0 : i32
    return %c0_i32, %c0_i32_0 : i32, i32
  }
  func.func @transform_10(%arg0: i32) -> (i32, i32) {
    %c0_i32 = arith.constant 0 : i32
    %c0_i32_0 = arith.constant 0 : i32
    %c0_i32_1 = arith.constant 0 : i32
    return %c0_i32, %c0_i32_0 : i32, i32
  }
}

</mosaic_0001>

<llo_original>
// kernel: tpu_custom_call.1
$region0: #{tpu_custom_call.1}
  #allocation0 [shape = 'u32[]', space=smem, size = 0x4, offset = 0x4, fixed_abs, tag = 'smem constant byte address 0x4 - core index']
  #allocation1 [shape = 'u32[72,128]{1,0:T(1,128)}', space=vmem, size = 0x9000, scoped, tag = 'internal scratch']
  %s0 = inlined_call_operand.hbm [shape: f32[32,64], index: 0, kind: input, shape index: {}]
  %s1 = inlined_call_operand.hbm [shape: f32[32,64], index: 1, kind: input, shape index: {}]
  %s2 = inlined_call_operand.hbm [shape: f32[32,64], index: 2, kind: input, shape index: {}]
  %s3 = inlined_call_operand.hbm [shape: bf16[3,64,64], index: 3, kind: input, shape index: {}]
  %s4 = inlined_call_operand.hbm [shape: bf16[3,64,64], index: 4, kind: input, shape index: {}]
  %s5 = inlined_call_operand.hbm [shape: f32[64,64], index: 5, kind: input, shape index: {}]
  %s6 = inlined_call_operand.vmem [shape: f32[1,64], index: 6, kind: input, shape index: {}]
  %s7 = inlined_call_operand.vmem [shape: f32[1,64], index: 7, kind: input, shape index: {}]
  %s8 = inlined_call_operand.vmem [shape: f32[1,64], index: 8, kind: input, shape index: {}]
  %s9 = inlined_call_operand.vmem [shape: f32[1,64], index: 9, kind: input, shape index: {}]
  %s10 = inlined_call_operand.hbm [shape: f32[32,64], index: 10, kind: output, shape index: {}]
  %s11 = sld [smem:[#allocation0]]
  $region74: #{tpu_custom_call.1} parent=0
    _
  %s13 = ssub.s32 1, %s11
  %s14 = scalar_select 0, %s13, %s11
  $region1: #{tpu_custom_call.1} parent=0
    #allocation2 [shape = 'u8[16384]{0}', space=vmem, size = 0x4000, scoped, tag = 'input window, operand 0, single buffered']
    #allocation3 [shape = 's32[1]{0}', space=sflag, size = 0x4, scoped, tag = 'scoped memory for tpu_custom_call.1']
    #allocation4 [shape = 's32[1]{0}', space=sflag, size = 0x4, scoped, tag = 'scoped memory for tpu_custom_call.1']
    #allocation5 [shape = 'u8[16384]{0}', space=vmem, size = 0x4000, scoped, tag = 'input window, operand 1, single buffered']
    #allocation6 [shape = 's32[1]{0}', space=sflag, size = 0x4, scoped, tag = 'scoped memory for tpu_custom_call.1']
    #allocation7 [shape = 'u8[16384]{0}', space=vmem, size = 0x4000, scoped, tag = 'input window, operand 2, single buffered']
    #allocation8 [shape = 'u8[49152]{0}', space=vmem, size = 0xc000, scoped, tag = 'input window, operand 3, single buffered']
    #allocation9 [shape = 's32[1]{0}', space=sflag, size = 0x4, scoped, tag = 'scoped memory for tpu_custom_call.1']
    #allocation10 [shape = 'u8[49152]{0}', space=vmem, size = 0xc000, scoped, tag = 'input window, operand 4, single buffered']
    #allocation11 [shape = 'u8[32768]{0}', space=vmem, size = 0x8000, scoped, tag = 'input window, operand 5, single buffered']
    #allocation12 [shape = 's32[1]{0}', space=sflag, size = 0x4, scoped, tag = 'scoped memory for tpu_custom_call.1']
    #allocation13 [shape = 'u8[16384]{0}', space=vmem, size = 0x4000, scoped, tag = 'output window, operand 0, single buffered']
    %15 = vsyncpa [#allocation3], 0
    %16 = vsyncpa [#allocation6], 0
    %17 = vsyncpa [#allocation9], 0
    %18 = vsyncpa [#allocation12], 0
    %19 = vsyncpa [#allocation4], 0
    // Predicated region
    $region2: #{tpu_custom_call.1} parent=1 // pred_check
      _
    $region3: #{tpu_custom_call.1} parent=1 // pred_check_branch
      %21 = sbr.rel (0) target = $region5
    $region4: #{tpu_custom_call.1} parent=1 // pred_region
      %23 = vsyncadd [#allocation3], 0
      %s24 = sshll.u32 %s0, 4
      %s25 = int_to_ptr.hbm [resolvable:$true] %s24
      %s26 = sshll.u32 [#allocation2], 4
      %s27 = int_to_ptr.vmem [resolvable:$true] %s26
      %32 = dma.hbm_to_vmem [thread:$0]  %s25, 512, %s27, [#allocation3], 128, 128, 8
    $region5: #{tpu_custom_call.1} parent=1 // pred_fallthru
      _
    // Predicated region
    $region6: #{tpu_custom_call.1} parent=1 // pred_check
      _
    $region7: #{tpu_custom_call.1} parent=1 // pred_check_branch
      %34 = sbr.rel (0) target = $region9
    $region8: #{tpu_custom_call.1} parent=1 // pred_region
      %36 = vsyncadd [#allocation6], 0
      %s37 = sshll.u32 %s1, 4
      %s38 = int_to_ptr.hbm [resolvable:$true] %s37
      %s39 = sshll.u32 [#allocation5], 4
      %s40 = int_to_ptr.vmem [resolvable:$true] %s39
      %45 = dma.hbm_to_vmem [thread:$0]  %s38, 512, %s40, [#allocation6], 128, 128, 8
    $region9: #{tpu_custom_call.1} parent=1 // pred_fallthru
      _
    // Predicated region
    $region10: #{tpu_custom_call.1} parent=1 // pred_check
      _
    $region11: #{tpu_custom_call.1} parent=1 // pred_check_branch
      %47 = sbr.rel (0) target = $region13
    $region12: #{tpu_custom_call.1} parent=1 // pred_region
      %49 = vsyncadd [#allocation6], 0
      %s50 = sshll.u32 %s2, 4
      %s51 = int_to_ptr.hbm [resolvable:$true] %s50
      %s52 = sshll.u32 [#allocation7], 4
      %s53 = int_to_ptr.vmem [resolvable:$true] %s52
      %58 = dma.hbm_to_vmem [thread:$0]  %s51, 512, %s53, [#allocation6], 128, 128, 8
    $region13: #{tpu_custom_call.1} parent=1 // pred_fallthru
      _
    // Predicated region
    $region14: #{tpu_custom_call.1} parent=1 // pred_check
      _
    $region15: #{tpu_custom_call.1} parent=1 // pred_check_branch
      %60 = sbr.rel (0) target = $region17
    $region16: #{tpu_custom_call.1} parent=1 // pred_region
      %62 = vsyncadd [#allocation9], 0
      %s63 = sshll.u32 %s3, 4
      %s64 = int_to_ptr.hbm [resolvable:$true] %s63
      %s65 = sshll.u32 [#allocation8], 4
      %s66 = int_to_ptr.vmem [resolvable:$true] %s65
      %71 = dma.hbm_to_vmem [thread:$0]  %s64, 1536, %s66, [#allocation9], 64, 64, 4
    $region17: #{tpu_custom_call.1} parent=1 // pred_fallthru
      _
    // Predicated region
    $region18: #{tpu_custom_call.1} parent=1 // pred_check
      _
    $region19: #{tpu_custom_call.1} parent=1 // pred_check_branch
      %73 = sbr.rel (0) target = $region21
    $region20: #{tpu_custom_call.1} parent=1 // pred_region
      %75 = vsyncadd [#allocation9], 0
      %s76 = sshll.u32 %s4, 4
      %s77 = int_to_ptr.hbm [resolvable:$true] %s76
      %s78 = sshll.u32 [#allocation10], 4
      %s79 = int_to_ptr.vmem [resolvable:$true] %s78
      %84 = dma.hbm_to_vmem [thread:$0]  %s77, 1536, %s79, [#allocation9], 64, 64, 4
    $region21: #{tpu_custom_call.1} parent=1 // pred_fallthru
      _
    // Predicated region
    $region22: #{tpu_custom_call.1} parent=1 // pred_check
      _
    $region23: #{tpu_custom_call.1} parent=1 // pred_check_branch
      %86 = sbr.rel (0) target = $region25
    $region24: #{tpu_custom_call.1} parent=1 // pred_region
      %88 = vsyncadd [#allocation12], 0
      %s89 = sshll.u32 %s5, 4
      %s90 = int_to_ptr.hbm [resolvable:$true] %s89
      %s91 = sshll.u32 [#allocation11], 4
      %s92 = int_to_ptr.vmem [resolvable:$true] %s91
      %97 = dma.hbm_to_vmem [thread:$0]  %s90, 1024, %s92, [#allocation12], 128, 128, 8
    $region25: #{tpu_custom_call.1} parent=1 // pred_fallthru
      _
    // Predicated region
    $region26: #{tpu_custom_call.1} parent=1 // pred_check
      _
    $region27: #{tpu_custom_call.1} parent=1 // pred_check_branch
      %99 = sbr.rel (0) target = $region29
    $region28: #{tpu_custom_call.1} parent=1 // pred_region
      _
    $region29: #{tpu_custom_call.1} parent=1 // pred_fallthru
      _
    // Predicated region
    $region30: #{tpu_custom_call.1} parent=1 // pred_check
      _
    $region31: #{tpu_custom_call.1} parent=1 // pred_check_branch
      %101 = sbr.rel (0) target = $region33
    $region32: #{tpu_custom_call.1} parent=1 // pred_region
      _
    $region33: #{tpu_custom_call.1} parent=1 // pred_fallthru
      _
    // Predicated region
    $region34: #{tpu_custom_call.1} parent=1 // pred_check
      _
    $region35: #{tpu_custom_call.1} parent=1 // pred_check_branch
      %103 = sbr.rel (0) target = $region37
    $region36: #{tpu_custom_call.1} parent=1 // pred_region
      _
    $region37: #{tpu_custom_call.1} parent=1 // pred_fallthru
      _
    // Predicated region
    $region38: #{tpu_custom_call.1} parent=1 // pred_check
      _
    $region39: #{tpu_custom_call.1} parent=1 // pred_check_branch
      %105 = sbr.rel (0) target = $region41
    $region40: #{tpu_custom_call.1} parent=1 // pred_region
      _
    $region41: #{tpu_custom_call.1} parent=1 // pred_fallthru
      _
    // Predicated region
    $region42: #{tpu_custom_call.1} parent=1 // pred_check
      _
    $region43: #{tpu_custom_call.1} parent=1 // pred_check_branch
      %107 = sbr.rel (0) target = $region45
    $region44: #{tpu_custom_call.1} parent=1 // pred_region
      %109 = dma.done [#allocation3], 512
    $region45: #{tpu_custom_call.1} parent=1 // pred_fallthru
      _
    // Predicated region
    $region46: #{tpu_custom_call.1} parent=1 // pred_check
      _
    $region47: #{tpu_custom_call.1} parent=1 // pred_check_branch
      %111 = sbr.rel (0) target = $region49
    $region48: #{tpu_custom_call.1} parent=1 // pred_region
      %113 = dma.done [#allocation6], 512
    $region49: #{tpu_custom_call.1} parent=1 // pred_fallthru
      _
    // Predicated region
    $region50: #{tpu_custom_call.1} parent=1 // pred_check
      _
    $region51: #{tpu_custom_call.1} parent=1 // pred_check_branch
      %115 = sbr.rel (0) target = $region53
    $region52: #{tpu_custom_call.1} parent=1 // pred_region
      %117 = dma.done [#allocation6], 512
    $region53: #{tpu_custom_call.1} parent=1 // pred_fallthru
      _
    // Predicated region
    $region54: #{tpu_custom_call.1} parent=1 // pred_check
      _
    $region55: #{tpu_custom_call.1} parent=1 // pred_check_branch
      %119 = sbr.rel (0) target = $region57
    $region56: #{tpu_custom_call.1} parent=1 // pred_region
      %121 = dma.done [#allocation9], 1536
    $region57: #{tpu_custom_call.1} parent=1 // pred_fallthru
      _
    // Predicated region
    $region58: #{tpu_custom_call.1} parent=1 // pred_check
      _
    $region59: #{tpu_custom_call.1} parent=1 // pred_check_branch
      %123 = sbr.rel (0) target = $region61
    $region60: #{tpu_custom_call.1} parent=1 // pred_region
      %125 = dma.done [#allocation9], 1536
    $region61: #{tpu_custom_call.1} parent=1 // pred_fallthru
      _
    // Predicated region
    $region62: #{tpu_custom_call.1} parent=1 // pred_check
      _
    $region63: #{tpu_custom_call.1} parent=1 // pred_check_branch
      %127 = sbr.rel (0) target = $region65
    $region64: #{tpu_custom_call.1} parent=1 // pred_region
      %129 = dma.done [#allocation12], 1024
    $region65: #{tpu_custom_call.1} parent=1 // pred_fallthru
      _
    %v131 = vld [vmem:[#allocation2] sm:$0xff]
    %v132 = vld [vmem:[#allocation2 + $0x8] sm:$0xff]
    %v133 = vld [vmem:[#allocation2 + $0x10] sm:$0xff]
    %v134 = vld [vmem:[#allocation2 + $0x18] sm:$0xff]
    %v135 = vld [vmem:[#allocation5] sm:$0xff]
    %v136 = vld [vmem:[#allocation5 + $0x8] sm:$0xff]
    %v137 = vld [vmem:[#allocation5 + $0x10] sm:$0xff]
    %v138 = vld [vmem:[#allocation5 + $0x18] sm:$0xff]
    %v139 = vld [vmem:[#allocation7] sm:$0xff]
    %v140 = vld [vmem:[#allocation7 + $0x8] sm:$0xff]
    %v141 = vld [vmem:[#allocation7 + $0x10] sm:$0xff]
    %v142 = vld [vmem:[#allocation7 + $0x18] sm:$0xff]
    %v143 = vld [vmem:[#allocation11] sm:$0xff]
    %v144 = vld [vmem:[#allocation11 + $0x8] sm:$0xff]
    %v145 = vld [vmem:[#allocation11 + $0x10] sm:$0xff]
    %v146 = vld [vmem:[#allocation11 + $0x18] sm:$0xff]
    %v147 = vld [vmem:[#allocation11 + $0x20] sm:$0xff]
    %v148 = vld [vmem:[#allocation11 + $0x28] sm:$0xff]
    %v149 = vld [vmem:[#allocation11 + $0x30] sm:$0xff]
    %v150 = vld [vmem:[#allocation11 + $0x38] sm:$0xff]
    %v151 = vrot.slane %v131, 7
    %v152 = vrot.slane %v132, 7
    %v153 = vrot.slane %v133, 7
    %v154 = vrot.slane %v134, 7
    %v155 = vlaneseq
    %v156 = vshrl.u32 %v155, 7
    %vm157 = vcmp.lt.s32.totalorder %v156, 1
    %v158 = vsel %vm157, %v153, %v154
    %v159 = vsel %vm157, %v152, %v153
    %v160 = vsel %vm157, %v151, %v152
    %v161 = vsel %vm157, %v154, %v151
    %v162 = vmul.f32 %v161, %v135
    %v163 = vmul.f32 %v160, %v136
    %v164 = vmul.f32 %v159, %v137
    %v165 = vmul.f32 %v158, %v138
    %v166 = vrot.slane %v131, 1
    %v167 = vrot.slane %v132, 1
    %v168 = vrot.slane %v133, 1
    %v169 = vrot.slane %v134, 1
    %vm170 = vcmp.lt.s32.totalorder %v156, 7
    %v171 = vsel %vm170, %v168, %v169
    %v172 = vsel %vm170, %v167, %v168
    %v173 = vsel %vm170, %v166, %v167
    %v174 = vsel %vm170, %v169, %v166
    %v175 = vmul.f32 %v173, %v139
    %v176 = vmul.f32 %v172, %v140
    %v177 = vmul.f32 %v171, %v141
    %v178 = vmul.f32 %v174, %v142
    %v179 = vpack.c.bf16 %v163, %v162
    %v180 = vpack.c.bf16 %v165, %v164
    %v181 = vld [vmem:[#allocation8] sm:$0xf]
    %v182 = vld [vmem:[#allocation8 + $0x4] sm:$0xf]
    %v183 = vld [vmem:[#allocation8 + $0x8] sm:$0xf]
    %v184 = vld [vmem:[#allocation8 + $0xc] sm:$0xf]
    %v185 = vld [vmem:[#allocation8 + $0x10] sm:$0xf]
    %v186 = vld [vmem:[#allocation8 + $0x14] sm:$0xf]
    %v187 = vld [vmem:[#allocation8 + $0x18] sm:$0xf]
    %v188 = vld [vmem:[#allocation8 + $0x1c] sm:$0xf]
    %v189 = vpack.c.bf16 %v132, %v131
    %v190 = vpack.c.bf16 %v134, %v133
    %s191 = scalar_lea.vmem [#allocation8], 32
    %v192 = vld [vmem:[%s191] sm:$0xf]
    %v193 = vld [vmem:[%s191 + $0x4] sm:$0xf]
    %v194 = vld [vmem:[%s191 + $0x8] sm:$0xf]
    %v195 = vld [vmem:[%s191 + $0xc] sm:$0xf]
    %v196 = vld [vmem:[%s191 + $0x10] sm:$0xf]
    %v197 = vld [vmem:[%s191 + $0x14] sm:$0xf]
    %v198 = vld [vmem:[%s191 + $0x18] sm:$0xf]
    %v199 = vld [vmem:[%s191 + $0x1c] sm:$0xf]
    %v208 = vunpack.c.l.b16 %v192
    %v209 = vunpack.c.l.b16 %v193
    %v210 = vunpack.c.l.b16 %v194
    %v211 = vunpack.c.l.b16 %v195
    %v212 = vunpack.c.l.b16 %v196
    %v213 = vunpack.c.l.b16 %v197
    %v214 = vunpack.c.l.b16 %v198
    %v215 = vunpack.c.l.b16 %v199
    %v216 = vpack.c.b16 %v209, %v208
    %v217 = vpack.c.b16 %v211, %v210
    %v218 = vpack.c.b16 %v213, %v212
    %v219 = vpack.c.b16 %v215, %v214
    %vm224 = vcmask 523264
    %v226 = vsel %vm224, %v189, 0
    %v229 = vsel %vm224, %v190, 0
    %231 = vmatpush.bf16.msra.mxu0 0
    %232 = vmatpush.bf16.msra.mxu0 0
    %233 = vmatpush.bf16.msra.mxu0 0
    %234 = vmatpush.bf16.msra.mxu0 0
    %235 = vmatpush.bf16.msra.mxu0 %v219
    %236 = vmatpush.bf16.msra.mxu0 %v218
    %237 = vmatpush.bf16.msra.mxu0 %v217
    %238 = vmatpush.bf16.msra.mxu0 %v216
    %239 = vmatmul.bf16.gmra.mxu0 %v226
    %v240 = vpop.f32.mrf.mxu0
    %v241 = vadd.f32 0.0, %v240
    %v242 = vpop.f32.mrf.mxu0
    %v243 = vadd.f32 0.0, %v242
    %244 = vmatmul.bf16.gmra.mxu0 %v229
    %v245 = vpop.f32.mrf.mxu0
    %v246 = vadd.f32 0.0, %v245
    %v247 = vpop.f32.mrf.mxu0
    %v248 = vadd.f32 0.0, %v247
    %249 = vdwg.mxu0
    %v258 = vunpack.c.l.b16 %v181
    %v259 = vunpack.c.l.b16 %v182
    %v260 = vunpack.c.l.b16 %v183
    %v261 = vunpack.c.l.b16 %v184
    %v262 = vunpack.c.l.b16 %v185
    %v263 = vunpack.c.l.b16 %v186
    %v264 = vunpack.c.l.b16 %v187
    %v265 = vunpack.c.l.b16 %v188
    %v266 = vpack.c.b16 %v259, %v258
    %v267 = vpack.c.b16 %v261, %v260
    %v268 = vpack.c.b16 %v263, %v262
    %v269 = vpack.c.b16 %v265, %v264
    %v275 = vsel %vm224, %v179, 0
    %v278 = vsel %vm224, %v180, 0
    %280 = vmatpush.bf16.msra.mxu0 0
    %281 = vmatpush.bf16.msra.mxu0 0
    %282 = vmatpush.bf16.msra.mxu0 0
    %283 = vmatpush.bf16.msra.mxu0 0
    %284 = vmatpush.bf16.msra.mxu0 %v269
    %285 = vmatpush.bf16.msra.mxu0 %v268
    %286 = vmatpush.bf16.msra.mxu0 %v267
    %287 = vmatpush.bf16.msra.mxu0 %v266
    %288 = vmatmul.bf16.gmra.mxu0 %v275
    %v289 = vpop.f32.mrf.mxu0
    %v290 = vadd.f32 %v241, %v289
    %v291 = vpop.f32.mrf.mxu0
    %v292 = vadd.f32 %v243, %v291
    %293 = vmatmul.bf16.gmra.mxu0 %v278
    %v294 = vpop.f32.mrf.mxu0
    %v295 = vadd.f32 %v246, %v294
    %v296 = vpop.f32.mrf.mxu0
    %v297 = vadd.f32 %v248, %v296
    %298 = vdwg.mxu0
    %v299 = vpack.c.bf16 %v176, %v175
    %v300 = vpack.c.bf16 %v178, %v177
    %s301 = scalar_lea.vmem [#allocation8], 64
    %v302 = vld [vmem:[%s301] sm:$0xf]
    %v303 = vld [vmem:[%s301 + $0x4] sm:$0xf]
    %v304 = vld [vmem:[%s301 + $0x8] sm:$0xf]
    %v305 = vld [vmem:[%s301 + $0xc] sm:$0xf]
    %v306 = vld [vmem:[%s301 + $0x10] sm:$0xf]
    %v307 = vld [vmem:[%s301 + $0x14] sm:$0xf]
    %v308 = vld [vmem:[%s301 + $0x18] sm:$0xf]
    %v309 = vld [vmem:[%s301 + $0x1c] sm:$0xf]
    %v318 = vunpack.c.l.b16 %v302
    %v319 = vunpack.c.l.b16 %v303
    %v320 = vunpack.c.l.b16 %v304
    %v321 = vunpack.c.l.b16 %v305
    %v322 = vunpack.c.l.b16 %v306
    %v323 = vunpack.c.l.b16 %v307
    %v324 = vunpack.c.l.b16 %v308
    %v325 = vunpack.c.l.b16 %v309
    %v326 = vpack.c.b16 %v319, %v318
    %v327 = vpack.c.b16 %v321, %v320
    %v328 = vpack.c.b16 %v323, %v322
    %v329 = vpack.c.b16 %v325, %v324
    %v335 = vsel %vm224, %v299, 0
    %v338 = vsel %vm224, %v300, 0
    %340 = vmatpush.bf16.msra.mxu0 0
    %341 = vmatpush.bf16.msra.mxu0 0
    %342 = vmatpush.bf16.msra.mxu0 0
    %343 = vmatpush.bf16.msra.mxu0 0
    %344 = vmatpush.bf16.msra.mxu0 %v329
    %345 = vmatpush.bf16.msra.mxu0 %v328
    %346 = vmatpush.bf16.msra.mxu0 %v327
    %347 = vmatpush.bf16.msra.mxu0 %v326
    %348 = vmatmul.bf16.gmra.mxu0 %v335
    %v349 = vpop.f32.mrf.mxu0
    %v350 = vadd.f32 0.0, %v349
    %v351 = vpop.f32.mrf.mxu0
    %v352 = vadd.f32 0.0, %v351
    %353 = vmatmul.bf16.gmra.mxu0 %v338
    %v354 = vpop.f32.mrf.mxu0
    %v355 = vadd.f32 0.0, %v354
    %v356 = vpop.f32.mrf.mxu0
    %v357 = vadd.f32 0.0, %v356
    %358 = vdwg.mxu0
    %v359 = vadd.f32 %v290, %v350
    %v360 = vadd.f32 %v292, %v352
    %v361 = vadd.f32 %v295, %v355
    %v362 = vadd.f32 %v297, %v357
    %v363 = vld [vmem:[%s6] sm:$0x1]
    %v364 = vld [vmem:[%s7] sm:$0x1]
    %v365 = vsel %vm224, %v359, 0.0
    %v366 = vsel %vm224, %v360, 0.0
    %v367 = vadd.f32 %v365, %v366
    %v368 = vsel %vm224, %v361, 0.0
    %v369 = vadd.f32 %v367, %v368
    %v370 = vsel %vm224, %v362, 0.0
    %v371 = vadd.f32 %v369, %v370
    %v372 = vrot.slane %v371, 4
    %v373 = vadd.f32 %v371, %v372
    %v374 = vrot.slane %v373, 2
    %v375 = vadd.f32 %v373, %v374
    %v376 = vrot.slane %v375, 1
    %v377 = vadd.f32 %v375, %v376
    %v379 = vsel %vm224, %v377, 0
    %381 = vmatpush.msra.mxu0 0.0
    %382 = vmatpush.msra.mxu0 0.0
    %383 = vmatpush.msra.mxu0 0.0
    %384 = vmatpush.msra.mxu0 0.0
    %385 = vmatpush.msra.mxu0 0.0
    %386 = vmatpush.msra.mxu0 0.0
    %387 = vmatpush.msra.mxu0 0.0
    %388 = vmatpush.msra.mxu0 0.0
    %389 = vmatpush.msra.mxu0 %v150
    %390 = vmatpush.msra.mxu0 %v149
    %391 = vmatpush.msra.mxu0 %v148
    %392 = vmatpush.msra.mxu0 %v147
    %393 = vmatpush.msra.mxu0 %v146
    %394 = vmatpush.msra.mxu0 %v145
    %395 = vmatpush.msra.mxu0 %v144
    %396 = vmatpush.msra.mxu0 %v143
    %397 = vmatmul.f32.gmra.mxu0 %v379
    %v398 = vpop.f32.mrf.mxu0
    %v399 = vadd.f32 0.0, %v398
    %400 = vdwg.mxu0
    %v401 = vperm.slane %v399, 0
    %v402 = vsub.f32 %v359, %v401
    %v403 = vsub.f32 %v360, %v401
    %v404 = vsub.f32 %v361, %v401
    %v405 = vsub.f32 %v362, %v401
    %v406 = vmul.f32 %v402, %v402
    %v407 = vmul.f32 %v403, %v403
    %v408 = vmul.f32 %v404, %v404
    %v409 = vmul.f32 %v405, %v405
    %v410 = vsel %vm224, %v406, 0.0
    %v411 = vsel %vm224, %v407, 0.0
    %v412 = vadd.f32 %v410, %v411
    %v413 = vsel %vm224, %v408, 0.0
    %v414 = vadd.f32 %v412, %v413
    %v415 = vsel %vm224, %v409, 0.0
    %v416 = vadd.f32 %v414, %v415
    %v417 = vrot.slane %v416, 4
    %v418 = vadd.f32 %v416, %v417
    %v419 = vrot.slane %v418, 2
    %v420 = vadd.f32 %v418, %v419
    %v421 = vrot.slane %v420, 1
    %v422 = vadd.f32 %v420, %v421
    %v424 = vsel %vm224, %v422, 0
    %426 = vmatpush.msra.mxu0 0.0
    %427 = vmatpush.msra.mxu0 0.0
    %428 = vmatpush.msra.mxu0 0.0
    %429 = vmatpush.msra.mxu0 0.0
    %430 = vmatpush.msra.mxu0 0.0
    %431 = vmatpush.msra.mxu0 0.0
    %432 = vmatpush.msra.mxu0 0.0
    %433 = vmatpush.msra.mxu0 0.0
    %434 = vmatpush.msra.mxu0 %v150
    %435 = vmatpush.msra.mxu0 %v149
    %436 = vmatpush.msra.mxu0 %v148
    %437 = vmatpush.msra.mxu0 %v147
    %438 = vmatpush.msra.mxu0 %v146
    %439 = vmatpush.msra.mxu0 %v145
    %440 = vmatpush.msra.mxu0 %v144
    %441 = vmatpush.msra.mxu0 %v143
    %442 = vmatmul.f32.gmra.mxu0 %v424
    %v443 = vpop.f32.mrf.mxu0
    %v444 = vadd.f32 1e-05, %v443
    %445 = vdwg.mxu0
    %v446 = vrsqrt.pop %v444
    %v447 = vmul.f32 %v446, %v444
    %v448 = vmul.f32 %v447, %v446
    %v449 = vmul.f32 0.5, %v448
    %v450 = vsub.f32 1.5, %v449
    %v451 = vmul.f32 %v446, %v450
    %vm452 = vweird.f32 %v444
    %vm453 = vweird.f32 %v446
    %vm454 = vmor %vm452, %vm453
    %v455 = vsel %vm454, %v446, %v451
    %v456 = vmul.f32 %v363, %v455
    %v458 = vperm.slane %v456, 0
    %v460 = vmul.f32 %v402, %v458
    %v461 = vmul.f32 %v403, %v458
    %v462 = vmul.f32 %v404, %v458
    %v463 = vmul.f32 %v405, %v458
    %v465 = vperm.slane %v364, 0
    %v467 = vadd.f32 %v460, %v465
    %v468 = vadd.f32 %v461, %v465
    %v469 = vadd.f32 %v462, %v465
    %v470 = vadd.f32 %v463, %v465
    %v471 = vmax.f32 %v467, 0.0
    %v472 = vmax.f32 %v468, 0.0
    %v473 = vmax.f32 %v469, 0.0
    %v474 = vmax.f32 %v470, 0.0
    %v475 = vrot.slane %v471, 7
    %v476 = vrot.slane %v472, 7
    %v477 = vrot.slane %v473, 7
    %v478 = vrot.slane %v474, 7
    %v479 = vsel %vm157, %v477, %v478
    %v480 = vsel %vm157, %v476, %v477
    %v481 = vsel %vm157, %v475, %v476
    %v482 = vsel %vm157, %v478, %v475
    %v483 = vmul.f32 %v482, %v135
    %v484 = vmul.f32 %v481, %v136
    %v485 = vmul.f32 %v480, %v137
    %v486 = vmul.f32 %v479, %v138
    %v487 = vrot.slane %v471, 1
    %v488 = vrot.slane %v472, 1
    %v489 = vrot.slane %v473, 1
    %v490 = vrot.slane %v474, 1
    %v491 = vsel %vm170, %v489, %v490
    %v492 = vsel %vm170, %v488, %v489
    %v493 = vsel %vm170, %v487, %v488
    %v494 = vsel %vm170, %v490, %v487
    %v495 = vmul.f32 %v493, %v139
    %v496 = vmul.f32 %v492, %v140
    %v497 = vmul.f32 %v491, %v141
    %v498 = vmul.f32 %v494, %v142
    %v499 = vpack.c.bf16 %v484, %v483
    %v500 = vpack.c.bf16 %v486, %v485
    %v501 = vld [vmem:[#allocation10] sm:$0xf]
    %v502 = vld [vmem:[#allocation10 + $0x4] sm:$0xf]
    %v503 = vld [vmem:[#allocation10 + $0x8] sm:$0xf]
    %v504 = vld [vmem:[#allocation10 + $0xc] sm:$0xf]
    %v505 = vld [vmem:[#allocation10 + $0x10] sm:$0xf]
    %v506 = vld [vmem:[#allocation10 + $0x14] sm:$0xf]
    %v507 = vld [vmem:[#allocation10 + $0x18] sm:$0xf]
    %v508 = vld [vmem:[#allocation10 + $0x1c] sm:$0xf]
    %v509 = vpack.c.bf16 %v472, %v471
    %v510 = vpack.c.bf16 %v474, %v473
    %s511 = scalar_lea.vmem [#allocation10], 32
    %v512 = vld [vmem:[%s511] sm:$0xf]
    %v513 = vld [vmem:[%s511 + $0x4] sm:$0xf]
    %v514 = vld [vmem:[%s511 + $0x8] sm:$0xf]
    %v515 = vld [vmem:[%s511 + $0xc] sm:$0xf]
    %v516 = vld [vmem:[%s511 + $0x10] sm:$0xf]
    %v517 = vld [vmem:[%s511 + $0x14] sm:$0xf]
    %v518 = vld [vmem:[%s511 + $0x18] sm:$0xf]
    %v519 = vld [vmem:[%s511 + $0x1c] sm:$0xf]
    %v528 = vunpack.c.l.b16 %v512
    %v529 = vunpack.c.l.b16 %v513
    %v530 = vunpack.c.l.b16 %v514
    %v531 = vunpack.c.l.b16 %v515
    %v532 = vunpack.c.l.b16 %v516
    %v533 = vunpack.c.l.b16 %v517
    %v534 = vunpack.c.l.b16 %v518
    %v535 = vunpack.c.l.b16 %v519
    %v536 = vpack.c.b16 %v529, %v528
    %v537 = vpack.c.b16 %v531, %v530
    %v538 = vpack.c.b16 %v533, %v532
    %v539 = vpack.c.b16 %v535, %v534
    %v545 = vsel %vm224, %v509, 0
    %v548 = vsel %vm224, %v510, 0
    %550 = vmatpush.bf16.msra.mxu0 0
    %551 = vmatpush.bf16.msra.mxu0 0
    %552 = vmatpush.bf16.msra.mxu0 0
    %553 = vmatpush.bf16.msra.mxu0 0
    %554 = vmatpush.bf16.msra.mxu0 %v539
    %555 = vmatpush.bf16.msra.mxu0 %v538
    %556 = vmatpush.bf16.msra.mxu0 %v537
    %557 = vmatpush.bf16.msra.mxu0 %v536
    %558 = vmatmul.bf16.gmra.mxu0 %v545
    %v559 = vpop.f32.mrf.mxu0
    %v560 = vadd.f32 0.0, %v559
    %v561 = vpop.f32.mrf.mxu0
    %v562 = vadd.f32 0.0, %v561
    %563 = vmatmul.bf16.gmra.mxu0 %v548
    %v564 = vpop.f32.mrf.mxu0
    %v565 = vadd.f32 0.0, %v564
    %v566 = vpop.f32.mrf.mxu0
    %v567 = vadd.f32 0.0, %v566
    %568 = vdwg.mxu0
    %v577 = vunpack.c.l.b16 %v501
    %v578 = vunpack.c.l.b16 %v502
    %v579 = vunpack.c.l.b16 %v503
    %v580 = vunpack.c.l.b16 %v504
    %v581 = vunpack.c.l.b16 %v505
    %v582 = vunpack.c.l.b16 %v506
    %v583 = vunpack.c.l.b16 %v507
    %v584 = vunpack.c.l.b16 %v508
    %v585 = vpack.c.b16 %v578, %v577
    %v586 = vpack.c.b16 %v580, %v579
    %v587 = vpack.c.b16 %v582, %v581
    %v588 = vpack.c.b16 %v584, %v583
    %v594 = vsel %vm224, %v499, 0
    %v597 = vsel %vm224, %v500, 0
    %599 = vmatpush.bf16.msra.mxu0 0
    %600 = vmatpush.bf16.msra.mxu0 0
    %601 = vmatpush.bf16.msra.mxu0 0
    %602 = vmatpush.bf16.msra.mxu0 0
    %603 = vmatpush.bf16.msra.mxu0 %v588
    %604 = vmatpush.bf16.msra.mxu0 %v587
    %605 = vmatpush.bf16.msra.mxu0 %v586
    %606 = vmatpush.bf16.msra.mxu0 %v585
    %607 = vmatmul.bf16.gmra.mxu0 %v594
    %v608 = vpop.f32.mrf.mxu0
    %v609 = vadd.f32 %v560, %v608
    %v610 = vpop.f32.mrf.mxu0
    %v611 = vadd.f32 %v562, %v610
    %612 = vmatmul.bf16.gmra.mxu0 %v597
    %v613 = vpop.f32.mrf.mxu0
    %v614 = vadd.f32 %v565, %v613
    %v615 = vpop.f32.mrf.mxu0
    %v616 = vadd.f32 %v567, %v615
    %617 = vdwg.mxu0
    %v618 = vpack.c.bf16 %v496, %v495
    %v619 = vpack.c.bf16 %v498, %v497
    %s620 = scalar_lea.vmem [#allocation10], 64
    %v621 = vld [vmem:[%s620] sm:$0xf]
    %v622 = vld [vmem:[%s620 + $0x4] sm:$0xf]
    %v623 = vld [vmem:[%s620 + $0x8] sm:$0xf]
    %v624 = vld [vmem:[%s620 + $0xc] sm:$0xf]
    %v625 = vld [vmem:[%s620 + $0x10] sm:$0xf]
    %v626 = vld [vmem:[%s620 + $0x14] sm:$0xf]
    %v627 = vld [vmem:[%s620 + $0x18] sm:$0xf]
    %v628 = vld [vmem:[%s620 + $0x1c] sm:$0xf]
    %v637 = vunpack.c.l.b16 %v621
    %v638 = vunpack.c.l.b16 %v622
    %v639 = vunpack.c.l.b16 %v623
    %v640 = vunpack.c.l.b16 %v624
    %v641 = vunpack.c.l.b16 %v625
    %v642 = vunpack.c.l.b16 %v626
    %v643 = vunpack.c.l.b16 %v627
    %v644 = vunpack.c.l.b16 %v628
    %v645 = vpack.c.b16 %v638, %v637
    %v646 = vpack.c.b16 %v640, %v639
    %v647 = vpack.c.b16 %v642, %v641
    %v648 = vpack.c.b16 %v644, %v643
    %v654 = vsel %vm224, %v618, 0
    %v657 = vsel %vm224, %v619, 0
    %659 = vmatpush.bf16.msra.mxu0 0
    %660 = vmatpush.bf16.msra.mxu0 0
    %661 = vmatpush.bf16.msra.mxu0 0
    %662 = vmatpush.bf16.msra.mxu0 0
    %663 = vmatpush.bf16.msra.mxu0 %v648
    %664 = vmatpush.bf16.msra.mxu0 %v647
    %665 = vmatpush.bf16.msra.mxu0 %v646
    %666 = vmatpush.bf16.msra.mxu0 %v645
    %667 = vmatmul.bf16.gmra.mxu0 %v654
    %v668 = vpop.f32.mrf.mxu0
    %v669 = vadd.f32 0.0, %v668
    %v670 = vpop.f32.mrf.mxu0
    %v671 = vadd.f32 0.0, %v670
    %672 = vmatmul.bf16.gmra.mxu0 %v657
    %v673 = vpop.f32.mrf.mxu0
    %v674 = vadd.f32 0.0, %v673
    %v675 = vpop.f32.mrf.mxu0
    %v676 = vadd.f32 0.0, %v675
    %677 = vdwg.mxu0
    %v678 = vadd.f32 %v609, %v669
    %v679 = vadd.f32 %v611, %v671
    %v680 = vadd.f32 %v614, %v674
    %v681 = vadd.f32 %v616, %v676
    %v682 = vld [vmem:[%s8] sm:$0x1]
    %v683 = vld [vmem:[%s9] sm:$0x1]
    %v684 = vsel %vm224, %v678, 0.0
    %v685 = vsel %vm224, %v679, 0.0
    %v686 = vadd.f32 %v684, %v685
    %v687 = vsel %vm224, %v680, 0.0
    %v688 = vadd.f32 %v686, %v687
    %v689 = vsel %vm224, %v681, 0.0
    %v690 = vadd.f32 %v688, %v689
    %v691 = vrot.slane %v690, 4
    %v692 = vadd.f32 %v690, %v691
    %v693 = vrot.slane %v692, 2
    %v694 = vadd.f32 %v692, %v693
    %v695 = vrot.slane %v694, 1
    %v696 = vadd.f32 %v694, %v695
    %v698 = vsel %vm224, %v696, 0
    %700 = vmatpush.msra.mxu0 0.0
    %701 = vmatpush.msra.mxu0 0.0
    %702 = vmatpush.msra.mxu0 0.0
    %703 = vmatpush.msra.mxu0 0.0
    %704 = vmatpush.msra.mxu0 0.0
    %705 = vmatpush.msra.mxu0 0.0
    %706 = vmatpush.msra.mxu0 0.0
    %707 = vmatpush.msra.mxu0 0.0
    %708 = vmatpush.msra.mxu0 %v150
    %709 = vmatpush.msra.mxu0 %v149
    %710 = vmatpush.msra.mxu0 %v148
    %711 = vmatpush.msra.mxu0 %v147
    %712 = vmatpush.msra.mxu0 %v146
    %713 = vmatpush.msra.mxu0 %v145
    %714 = vmatpush.msra.mxu0 %v144
    %715 = vmatpush.msra.mxu0 %v143
    %716 = vmatmul.f32.gmra.mxu0 %v698
    %v717 = vpop.f32.mrf.mxu0
    %v718 = vadd.f32 0.0, %v717
    %719 = vdwg.mxu0
    %v720 = vperm.slane %v718, 0
    %v721 = vsub.f32 %v678, %v720
    %v722 = vsub.f32 %v679, %v720
    %v723 = vsub.f32 %v680, %v720
    %v724 = vsub.f32 %v681, %v720
    %v725 = vmul.f32 %v721, %v721
    %v726 = vmul.f32 %v722, %v722
    %v727 = vmul.f32 %v723, %v723
    %v728 = vmul.f32 %v724, %v724
    %v729 = vsel %vm224, %v725, 0.0
    %v730 = vsel %vm224, %v726, 0.0
    %v731 = vadd.f32 %v729, %v730
    %v732 = vsel %vm224, %v727, 0.0
    %v733 = vadd.f32 %v731, %v732
    %v734 = vsel %vm224, %v728, 0.0
    %v735 = vadd.f32 %v733, %v734
    %v736 = vrot.slane %v735, 4
    %v737 = vadd.f32 %v735, %v736
    %v738 = vrot.slane %v737, 2
    %v739 = vadd.f32 %v737, %v738
    %v740 = vrot.slane %v739, 1
    %v741 = vadd.f32 %v739, %v740
    %v743 = vsel %vm224, %v741, 0
    %745 = vmatpush.msra.mxu0 0.0
    %746 = vmatpush.msra.mxu0 0.0
    %747 = vmatpush.msra.mxu0 0.0
    %748 = vmatpush.msra.mxu0 0.0
    %749 = vmatpush.msra.mxu0 0.0
    %750 = vmatpush.msra.mxu0 0.0
    %751 = vmatpush.msra.mxu0 0.0
    %752 = vmatpush.msra.mxu0 0.0
    %753 = vmatpush.msra.mxu0 %v150
    %754 = vmatpush.msra.mxu0 %v149
    %755 = vmatpush.msra.mxu0 %v148
    %756 = vmatpush.msra.mxu0 %v147
    %757 = vmatpush.msra.mxu0 %v146
    %758 = vmatpush.msra.mxu0 %v145
    %759 = vmatpush.msra.mxu0 %v144
    %760 = vmatpush.msra.mxu0 %v143
    %761 = vmatmul.f32.gmra.mxu0 %v743
    %v762 = vpop.f32.mrf.mxu0
    %v763 = vadd.f32 1e-05, %v762
    %764 = vdwg.mxu0
    %v765 = vrsqrt.pop %v763
    %v766 = vmul.f32 %v765, %v763
    %v767 = vmul.f32 %v766, %v765
    %v768 = vmul.f32 0.5, %v767
    %v769 = vsub.f32 1.5, %v768
    %v770 = vmul.f32 %v765, %v769
    %vm771 = vweird.f32 %v763
    %vm772 = vweird.f32 %v765
    %vm773 = vmor %vm771, %vm772
    %v774 = vsel %vm773, %v765, %v770
    %v775 = vmul.f32 %v682, %v774
    %v777 = vperm.slane %v775, 0
    %v779 = vmul.f32 %v721, %v777
    %v780 = vmul.f32 %v722, %v777
    %v781 = vmul.f32 %v723, %v777
    %v782 = vmul.f32 %v724, %v777
    %v784 = vperm.slane %v683, 0
    %v786 = vadd.f32 %v779, %v784
    %v787 = vadd.f32 %v780, %v784
    %v788 = vadd.f32 %v781, %v784
    %v789 = vadd.f32 %v782, %v784
    %v790 = vadd.f32 %v786, %v131
    %v791 = vadd.f32 %v787, %v132
    %v792 = vadd.f32 %v788, %v133
    %v793 = vadd.f32 %v789, %v134
    %v794 = vmax.f32 %v790, 0.0
    %v795 = vmax.f32 %v791, 0.0
    %v796 = vmax.f32 %v792, 0.0
    %v797 = vmax.f32 %v793, 0.0
    %798 = vst.msk [vmem:[#allocation13] sm:$0xff] %vm224, %v794
    %799 = vst.msk [vmem:[#allocation13 + $0x8] sm:$0xff] %vm224, %v795
    %800 = vst.msk [vmem:[#allocation13 + $0x10] sm:$0xff] %vm224, %v796
    %801 = vst.msk [vmem:[#allocation13 + $0x18] sm:$0xff] %vm224, %v797
    // Predicated region
    $region66: #{tpu_custom_call.1} parent=1 // pred_check
      _
    $region67: #{tpu_custom_call.1} parent=1 // pred_check_branch
      %803 = sbr.rel (0) target = $region69
    $region68: #{tpu_custom_call.1} parent=1 // pred_region
      %805 = vsyncadd [#allocation4], 0
      %s806 = sshll.u32 [#allocation13], 4
      %s807 = int_to_ptr.vmem [resolvable:$true] %s806
      %s808 = sshll.u32 %s10, 4
      %s809 = int_to_ptr.hbm [resolvable:$true] %s808
      %814 = dma.vmem_to_hbm [thread:$0]  %s807, 512, %s809, [#allocation4], 128, 128, 8
    $region69: #{tpu_custom_call.1} parent=1 // pred_fallthru
      _
    // Predicated region
    $region70: #{tpu_custom_call.1} parent=1 // pred_check
      _
    $region71: #{tpu_custom_call.1} parent=1 // pred_check_branch
      %816 = sbr.rel (0) target = $region73
    $region72: #{tpu_custom_call.1} parent=1 // pred_region
      %818 = dma.done [#allocation4], 512
    $region73: #{tpu_custom_call.1} parent=1 // pred_fallthru
      _
    %819 = vsyncpa [#allocation3], 1
    %820 = vsyncpa [#allocation6], 1
    %821 = vsyncpa [#allocation9], 1
    %822 = vsyncpa [#allocation12], 1
    %823 = vsyncpa [#allocation4], 1

</llo_original>
